<compile_context>
chip_gen: v5e
topology: v5e:2x2
jax: 0.10.0
libtpu: 0.0.40
codegen_flags: <defaults>
</compile_context>

<pallas_src>
import functools
import numpy as np
import jax
import jax.numpy as jnp
from jax.experimental import pallas as pl
from jax.experimental.pallas import tpu as pltpu


def eca_kernel_size(input_nc, gamma=2.0, b=1.0):
    t = int(abs(np.log2(input_nc) + b) / gamma)
    return t if t % 2 else t + 1


def _cdiv(a, b):
    return -(-a // b)


# --------------------------------------------------------------------------
# Pallas kernels
# --------------------------------------------------------------------------

def _pool_sum_kernel(x_ref, sum_ref, *, hw, t_hw, ragged):
    # x_ref:   (t_r, t_hw) spatial tile of the (B*C, HW) slab
    # sum_ref: (t_r, 1)    f32 accumulator, resident across the HW grid axis
    t = pl.program_id(1)

    @pl.when(t == 0)
    def _():
        sum_ref[...] = jnp.zeros_like(sum_ref)

    xv = x_ref[...].astype(jnp.float32)
    if ragged:
        # Final spatial tile sticks out past HW: OOB lanes of a partial input
        # block are undefined, so zero them before the reduction.
        lane = jax.lax.broadcasted_iota(jnp.int32, xv.shape, 1)
        xv = jnp.where(t * t_hw + lane < hw, xv, 0.0)
    sum_ref[...] += jnp.sum(xv, axis=-1, keepdims=True)


def _scale_kernel(x_ref, s_ref, o_ref):
    # x_ref: (t_r, t_hw); s_ref: (t_r, 1) already in x.dtype; o_ref like x_ref.
    # No mask needed: OOB writes of a partial output block are dropped.
    o_ref[...] = x_ref[...] * s_ref[...]


# --------------------------------------------------------------------------
# Tiling / wrapper
# --------------------------------------------------------------------------

def _vmem_budget_bytes():
    cap = None
    try:
        cap = getattr(pltpu.get_tpu_info(), "vmem_capacity_bytes", None)
    except Exception:
        cap = None
    if not cap:
        cap = 64 * 1024 * 1024                     # conservative (v7x-sized) fallback
    # Leave headroom for Mosaic internal scratch; clamp to a sane range.
    return int(min(max(int(cap * 0.65), 32 * 1024 * 1024), 96 * 1024 * 1024))


def _pick_block(rows, hw, itemsize, target_bytes, row_align):
    """Largest (t_r, t_hw) sublane/lane-aligned block under target_bytes.

    Prefers full-HW rows (contiguous DMA) and fuses rows; keeps >= 2 row blocks
    whenever possible so the 'parallel' row axis can span both v7x cores.
    """
    hw_tiles = _cdiv(hw, 128)
    r_tiles = _cdiv(rows, row_align)

    t_hw_full = hw_tiles * 128
    if row_align * t_hw_full * itemsize <= target_bytes:
        t_hw = t_hw_full
        n_groups = max(1, target_bytes // (row_align * t_hw * itemsize))
        t_r = min(r_tiles, n_groups) * row_align
    else:
        # Even one row group with full HW exceeds the target: tile HW instead.
        t_r = row_align
        lanes_fit = max(128, ((target_bytes // (t_r * itemsize)) // 128) * 128)
        t_hw = min(t_hw_full, lanes_fit)

    if r_tiles >= 2:                               # guarantee >= 2 row blocks
        t_r = min(t_r, _cdiv(r_tiles, 2) * row_align)
    return t_r, t_hw


def _channel_conv_sigmoid(mean_bc, taps):
    """k-tap 1-D conv over the channel axis of the pooled (B, C) vector + sigmoid."""
    C = mean_bc.shape[1]
    k = taps.shape[0]
    pad = (k - 1) // 2
    ypad = jnp.pad(mean_bc, ((0, 0), (pad, pad)))
    conv = jnp.zeros_like(mean_bc)
    for j in range(k):                             # k static shifted multiply-adds
        conv = conv + taps[j] * ypad[:, j:j + C]
    return jax.nn.sigmoid(conv)


def eca_block(x, conv_weight):
    """x: (B, C, H, W). conv_weight: (k,) = Conv1d(1, 1, k, bias=False) taps."""
    B, C, H, W = x.shape
    HW = H * W
    R = B * C
    itemsize = jnp.dtype(x.dtype).itemsize
    row_align = 8 * max(1, 4 // itemsize)          # 8 sublanes (f32) / 16 (bf16)

    budget = _vmem_budget_bytes()
    # Pass 1 streams a single array (tiny resident output) -> bigger blocks.
    t_r1, t_hw1 = _pick_block(R, HW, itemsize,
                              min(budget // 3, 16 * 1024 * 1024), row_align)
    # Pass 2 double-buffers an input block and an output block.
    t_r2, t_hw2 = _pick_block(R, HW, itemsize,
                              min(budget // 5, 8 * 1024 * 1024), row_align)

    x2 = x.reshape(R, HW)                          # row-major view, no copy

    n_r1, n_hw1 = _cdiv(R, t_r1), _cdiv(HW, t_hw1)
    n_r2, n_hw2 = _cdiv(R, t_r2), _cdiv(HW, t_hw2)

    # ---- Pass 1: per-(batch, channel) spatial sums, accumulated in f32 ----
    pool = functools.partial(_pool_sum_kernel, hw=HW, t_hw=t_hw1,
                             ragged=(HW % t_hw1) != 0)
    sums = pl.pallas_call(
        pool,
        out_shape=jax.ShapeDtypeStruct((R, 1), jnp.float32),
        grid_spec=pltpu.PrefetchScalarGridSpec(
            num_scalar_prefetch=0,
            grid=(n_r1, n_hw1),
            in_specs=[pl.BlockSpec((t_r1, t_hw1), lambda r, t: (r, t))],
            out_specs=pl.BlockSpec((t_r1, 1), lambda r, t: (r, 0)),
        ),
        compiler_params=pltpu.CompilerParams(
            dimension_semantics=("parallel", "arbitrary"),
            vmem_limit_bytes=budget),
    )(x2)

    # ---- Tiny (B, C) glue: mean, k-tap channel conv, sigmoid (plain XLA) ----
    mean = sums.reshape(B, C) * (1.0 / float(HW))  # divide by true HW
    s = _channel_conv_sigmoid(mean, conv_weight.astype(jnp.float32))
    s2 = s.reshape(R, 1).astype(x.dtype)           # cast once, outside hot loop

    # ---- Pass 2: broadcast scale, fully parallel grid ----
    out2 = pl.pallas_call(
        _scale_kernel,
        out_shape=jax.ShapeDtypeStruct((R, HW), x.dtype),
        grid_spec=pltpu.PrefetchScalarGridSpec(
            num_scalar_prefetch=0,
            grid=(n_r2, n_hw2),
            in_specs=[pl.BlockSpec((t_r2, t_hw2), lambda r, t: (r, t)),
                      pl.BlockSpec((t_r2, 1), lambda r, t: (r, 0))],
            out_specs=pl.BlockSpec((t_r2, t_hw2), lambda r, t: (r, t)),
        ),
        compiler_params=pltpu.CompilerParams(
            dimension_semantics=("parallel", "parallel"),
            vmem_limit_bytes=budget),
    )(x2, s2)

    return out2.reshape(B, C, H, W)


# --------------------------------------------------------------------------
# Pure-JAX reference + self-test
# --------------------------------------------------------------------------

def eca_reference(x, conv_weight):
    B, C, H, W = x.shape
    k = conv_weight.shape[0]
    pad = (k - 1) // 2
    y = jnp.mean(x.astype(jnp.float32), axis=(2, 3))          # (B, C)
    ypad = jnp.pad(y, ((0, 0), (pad, pad)))
    conv = jnp.zeros((B, C), jnp.float32)
    for j in range(k):
        conv = conv + conv_weight[j] * ypad[:, j:j + C]
    s = jax.nn.sigmoid(conv)
    return x * s[:, :, None, None].astype(x.dtype)


if __name__ == "__main__":
    def run_case(B, C, H, W, key):
        k = eca_kernel_size(C)
        kx, kw = jax.random.split(key)
        x = jax.random.normal(kx, (B, C, H, W), dtype=jnp.float32)
        bound = 1.0 / np.sqrt(k)                   # Conv1d(1,1,k,bias=False) init range
        conv_w = jax.random.uniform(kw, (k,), jnp.float32, -bound, bound)
        out = jax.block_until_ready(jax.jit(eca_block)(x, conv_w))
        ref = eca_reference(x, conv_w)
        np.testing.assert_allclose(np.asarray(out), np.asarray(ref),
                                   rtol=1e-5, atol=1e-5)

    key = jax.random.PRNGKey(0)
    k1, k2 = jax.random.split(key)
    run_case(2, 8, 16, 16, k1)   # lane-aligned H*W
    run_case(2, 8, 15, 15, k2)   # ragged H*W -> exercises in-kernel mask path

    print("KERNEL_OK")
</pallas_src>

<mosaic_0001>
module attributes {stable_mosaic.version = 11 : i64} {
  func.func @_pool_sum_kernel(%arg0: i32, %arg1: i32, %arg2: memref<8x256xf32, #tpu.memory_space<vmem>>, %arg3: memref<8x1xf32, #tpu.memory_space<vmem>>) attributes {dimension_semantics = [#tpu.dimension_semantics<parallel>, #tpu.dimension_semantics<arbitrary>], iteration_bounds = array<i64: 2, 1>, scalar_prefetch = 0 : i64, scratch_operands = 0 : i64, tpu.core_type = #tpu.core_type<tc>, window_params = [{transform_indices = @transform_0, window_bounds = array<i64: 8, 256>}, {transform_indices = @transform_1, window_bounds = array<i64: 8, 1>}]} {
    %c0_i32 = arith.constant 0 : i32
    %0 = arith.cmpi eq, %arg1, %c0_i32 : i32
    %1 = arith.extui %0 : i1 to i32
    %c0_i32_0 = arith.constant 0 : i32
    %2 = arith.cmpi ne, %1, %c0_i32_0 : i32
    scf.if %2 {
      %cst_6 = arith.constant 0.000000e+00 : f32
      %9 = vector.broadcast %cst_6 : f32 to vector<8x1xf32>
      %c0_7 = arith.constant 0 : index
      %c0_8 = arith.constant 0 : index
      %10 = vector.load %arg3[%c0_7, %c0_8] : memref<8x1xf32, #tpu.memory_space<vmem>>, vector<8x1xf32>
      tpu.vector_store %arg3[%c0_7, %c0_8], %9 {strides = array<i32>} : memref<8x1xf32, #tpu.memory_space<vmem>>, vector<8x1xf32>,
    } else {
    }
    %c0 = arith.constant 0 : index
    %c0_1 = arith.constant 0 : index
    %3 = vector.load %arg2[%c0, %c0_1] : memref<8x256xf32, #tpu.memory_space<vmem>>, vector<8x256xf32>
    %c0_2 = arith.constant 0 : index
    %c0_3 = arith.constant 0 : index
    %4 = vector.load %arg3[%c0_2, %c0_3] : memref<8x1xf32, #tpu.memory_space<vmem>>, vector<8x1xf32>
    %cst = arith.constant dense<0.000000e+00> : vector<8xf32>
    %5 = vector.multi_reduction <add>, %3, %cst [1] : vector<8x256xf32> to vector<8xf32>
    %6 = vector.shape_cast %5 : vector<8xf32> to vector<8x1xf32>
    %7 = arith.addf %4, %6 : vector<8x1xf32>
    %c0_4 = arith.constant 0 : index
    %c0_5 = arith.constant 0 : index
    %8 = vector.load %arg3[%c0_4, %c0_5] : memref<8x1xf32, #tpu.memory_space<vmem>>, vector<8x1xf32>
    tpu.vector_store %arg3[%c0_4, %c0_5], %7 {strides = array<i32>} : memref<8x1xf32, #tpu.memory_space<vmem>>, vector<8x1xf32>,
    return
  }
  func.func @transform_0(%arg0: i32, %arg1: i32) -> (i32, i32) {
    %c0_i32 = arith.constant 0 : i32
    return %arg0, %arg1 : i32, i32
  }
  func.func @transform_1(%arg0: i32, %arg1: i32) -> (i32, i32) {
    %c0_i32 = arith.constant 0 : i32
    %c0_i32_0 = arith.constant 0 : i32
    return %arg0, %c0_i32 : i32, i32
  }
}

module attributes {stable_mosaic.version = 11 : i64} {
  func.func @_scale_kernel(%arg0: i32, %arg1: i32, %arg2: memref<8x256xf32, #tpu.memory_space<vmem>>, %arg3: memref<8x1xf32, #tpu.memory_space<vmem>>, %arg4: memref<8x256xf32, #tpu.memory_space<vmem>>) attributes {dimension_semantics = [#tpu.dimension_semantics<parallel>, #tpu.dimension_semantics<parallel>], iteration_bounds = array<i64: 2, 1>, scalar_prefetch = 0 : i64, scratch_operands = 0 : i64, tpu.core_type = #tpu.core_type<tc>, window_params = [{transform_indices = @transform_0, window_bounds = array<i64: 8, 256>}, {transform_indices = @transform_1, window_bounds = array<i64: 8, 1>}, {transform_indices = @transform_2, window_bounds = array<i64: 8, 256>}]} {
    %c0 = arith.constant 0 : index
    %c0_0 = arith.constant 0 : index
    %0 = vector.load %arg2[%c0, %c0_0] : memref<8x256xf32, #tpu.memory_space<vmem>>, vector<8x256xf32>
    %c0_1 = arith.constant 0 : index
    %c0_2 = arith.constant 0 : index
    %1 = vector.load %arg3[%c0_1, %c0_2] : memref<8x1xf32, #tpu.memory_space<vmem>>, vector<8x1xf32>
    %2 = vector.broadcast %1 : vector<8x1xf32> to vector<8x256xf32>
    %3 = arith.mulf %0, %2 : vector<8x256xf32>
    %c0_3 = arith.constant 0 : index
    %c0_4 = arith.constant 0 : index
    %4 = vector.load %arg4[%c0_3, %c0_4] : memref<8x256xf32, #tpu.memory_space<vmem>>, vector<8x256xf32>
    tpu.vector_store %arg4[%c0_3, %c0_4], %3 {strides = array<i32>} : memref<8x256xf32, #tpu.memory_space<vmem>>, vector<8x256xf32>,
    return
  }
  func.func @transform_0(%arg0: i32, %arg1: i32) -> (i32, i32) {
    %c0_i32 = arith.constant 0 : i32
    return %arg0, %arg1 : i32, i32
  }
  func.func @transform_1(%arg0: i32, %arg1: i32) -> (i32, i32) {
    %c0_i32 = arith.constant 0 : i32
    %c0_i32_0 = arith.constant 0 : i32
    return %arg0, %c0_i32 : i32, i32
  }
  func.func @transform_2(%arg0: i32, %arg1: i32) -> (i32, i32) {
    %c0_i32 = arith.constant 0 : i32
    return %arg0, %arg1 : i32, i32
  }
}

</mosaic_0001>

<llo_original>
// kernel: eca_block.2
$region0: #{eca_block.2}
  #allocation0 [shape = 'u32[]', space=smem, size = 0x4, offset = 0x4, fixed_abs, tag = 'smem constant byte address 0x4 - core index']
  #allocation1 [shape = 'u32[72,128]{1,0:T(1,128)}', space=vmem, size = 0x9000, scoped, tag = 'internal scratch']
  %s0 = inlined_call_operand.vmem [shape: f32[16,256], index: 0, kind: input, shape index: {}]
  %s1 = inlined_call_operand.vmem [shape: f32[16,1], index: 1, kind: output, shape index: {}]
  %s2 = sld [smem:[#allocation0]]
  $region41: #{eca_block.2} parent=0
    _
  %s4 = ssub.s32 1, %s2
  %s5 = scalar_select 0, %s4, %s2
  loop: start=0, step=1, limit=4
  $region2: #{eca_block.2} parent=0 // loop_pre_header
    _
  $region3: #{eca_block.2} parent=0 // loop_header
    %s7 = sphi 0, %s11
    %p8 = scmp.ge.s32.totalorder %s7, 4
    %s14 = sphi 0, %s26
    %s15 = sphi 0, %s22
    %s16 = sphi 0, %s14
    %s17 = sphi 0, %s15
    %s18 = sphi 0, %s16
    %s19 = sphi 0, %s17
    %s31 = sphi 0, %s33
    %s34 = sphi 0, %s31
    %s35 = sphi 0, %s34
    %s51 = sphi 0, %s35
    %s57 = sphi 0, %s59
    %s60 = sphi 0, %s57
    %s61 = sphi 0, %s60
    %s77 = sphi 0, %s61
  $region4: #{eca_block.2} parent=0 // loop_header_branch
    %10 = sbr.rel (%p8) target = $region8
  $region5: #{eca_block.2} parent=0 // loop_body
    %s12 = ssub.s32 %s7, 1
    %s13 = ssub.s32 %s7, 2
    %s20 = sadd.s32 1, %s15
    %p21 = scmp.ge.s32.totalorder %s20, 1
    %s22 = scalar_select %p21, 0, %s20
    %s23 = sadd.s32 1, %s14
    %s24 = scalar_select %p21, %s23, %s14
    %p25 = scmp.ge.s32.totalorder %s24, 2
    %s26 = scalar_select %p25, 0, %s24
    %s27 = ssub.s32 %s14, %s26
    %s28 = ssub.s32 %s15, %s22
    %s29 = sor.u32 %s27, %s28
    %p30 = scmp.eq.s32.totalorder %s29, 0
    %s32 = sadd.s32 %s31, 1
    %s33 = scalar_select %p30, %s31, %s32
    %p36 = pneg %p30
    %p37 = scmp.eq.s32.totalorder %s7, 1
    %p38 = por %p36, %p37
    %p39 = scmp.ne.s32.totalorder %s31, %s34
    %p40 = scmp.eq.s32.totalorder %s7, 0
    %p41 = por %p39, %p40
    %p42 = scmp.ne.s32.totalorder %s31, %s34
    %p43 = scmp.eq.s32.totalorder %s12, 1
    %p44 = por %p42, %p43
    %p45 = scmp.ne.s32.totalorder %s34, %s35
    %p46 = scmp.eq.s32.totalorder %s12, 0
    %p47 = por %p45, %p46
    %p48 = scmp.ne.s32.totalorder %s34, %s35
    %p49 = scmp.eq.s32.totalorder %s13, 1
    %p50 = por %p48, %p49
    %p52 = scmp.ne.s32.totalorder %s35, %s51
    %p53 = scmp.eq.s32.totalorder %s13, 0
    %p54 = por %p52, %p53
    %s55 = ssub.s32 %s14, %s26
    %p56 = scmp.eq.s32.totalorder %s55, 0
    %s58 = sadd.s32 %s57, 1
    %s59 = scalar_select %p56, %s57, %s58
    %p62 = pneg %p56
    %p63 = scmp.eq.s32.totalorder %s7, 1
    %p64 = por %p62, %p63
    %p65 = scmp.ne.s32.totalorder %s57, %s60
    %p66 = scmp.eq.s32.totalorder %s7, 0
    %p67 = por %p65, %p66
    %p68 = scmp.ne.s32.totalorder %s57, %s60
    %p69 = scmp.eq.s32.totalorder %s12, 1
    %p70 = por %p68, %p69
    %p71 = scmp.ne.s32.totalorder %s60, %s61
    %p72 = scmp.eq.s32.totalorder %s12, 0
    %p73 = por %p71, %p72
    %p74 = scmp.ne.s32.totalorder %s60, %s61
    %p75 = scmp.eq.s32.totalorder %s13, 1
    %p76 = por %p74, %p75
    %p78 = scmp.ne.s32.totalorder %s61, %s77
    %p79 = scmp.eq.s32.totalorder %s13, 0
    %p80 = por %p78, %p79
    %p81 = scmp.le.s32.totalorder 1, %s7
    %p82 = scmp.lt.s32.totalorder %s7, 3
    %p83 = pnand %p81, %p82
    %p84 = pneg %p83
    // Predicated region
    $region9: #{eca_block.2} parent=5 // pred_check
      _
    $region10: #{eca_block.2} parent=5 // pred_check_branch
      %86 = sbr.rel (%p83) target = $region12
    $region11: #{eca_block.2} parent=5 // pred_region
      %s87 = ssub.s32 %s7, 1
    $region12: #{eca_block.2} parent=5 // pred_fallthru
      _
    %p88 = scmp.lt.s32.totalorder %s7, 2
    // Predicated region
    $region13: #{eca_block.2} parent=5 // pred_check
      %p89 = pneg %p88
    $region14: #{eca_block.2} parent=5 // pred_check_branch
      %91 = sbr.rel (%p89) target = $region16
    $region15: #{eca_block.2} parent=5 // pred_region
      // Predicated region
      $region17: #{eca_block.2} parent=15 // pred_check
        %p92 = pneg %p41
      $region18: #{eca_block.2} parent=15 // pred_check_branch
        %94 = sbr.rel (%p92) target = $region20
      $region19: #{eca_block.2} parent=15 // pred_region
        %s95 = smul.u32 2, %s15
        %p96 = scmp.lt.s32.totalorder %s14, 1
        %s97 = scalar_select %p96, %s14, 1
        %p98 = scmp.lt.s32.totalorder %s95, 1
        %s99 = scalar_select %p98, %s95, 1
        %s100 = smul.addr %s97, 2
        %s101 = sadd.s32 %s99, %s100
        %s102 = smul.addr %s101, 8
        %s103 = scalar_lea.vmem %s0, %s102
        %s104 = smul.u32 2, %s15
      $region20: #{eca_block.2} parent=15 // pred_fallthru
        _
    $region16: #{eca_block.2} parent=5 // pred_fallthru
      _
    %p105 = scmp.le.s32.totalorder 1, %s7
    %p106 = scmp.lt.s32.totalorder %s7, 3
    %p107 = pnand %p105, %p106
    %p108 = pneg %p107
    // Predicated region
    $region21: #{eca_block.2} parent=5 // pred_check
      _
    $region22: #{eca_block.2} parent=5 // pred_check_branch
      %110 = sbr.rel (%p107) target = $region24
    $region23: #{eca_block.2} parent=5 // pred_region
      %s111 = ssub.s32 %s7, 1
      %s112 = smul.u32 2, %s17
      %p113 = scmp.lt.s32.totalorder %s16, 1
      %s114 = scalar_select %p113, %s16, 1
      %p115 = scmp.lt.s32.totalorder %s112, 1
      %s116 = scalar_select %p115, %s112, 1
      %s117 = smul.addr %s114, 2
      %s118 = sadd.s32 %s116, %s117
      %s119 = smul.addr %s118, 8
      %s120 = scalar_lea.vmem %s0, %s119
      %p121 = pneg %p47
      %p122 = pneg %p44
      %p123 = pneg %p73
      %p124 = pneg %p70
      %p125 = scmp.lt.s32.totalorder %s16, 1
      %s126 = scalar_select %p125, %s16, 1
      %s127 = smul.addr %s126, 8
      %s128 = scalar_lea.vmem %s1, %s127
      %s129 = smul.u32 2, %s17
      %p130 = scmp.lt.s32.totalorder %s16, 1
      %s131 = scalar_select %p130, %s16, 1
      %p132 = scmp.lt.s32.totalorder %s129, 1
      %s133 = scalar_select %p132, %s129, 1
      %s134 = smul.addr %s131, 2
      %s135 = sadd.s32 %s133, %s134
      %s136 = smul.addr %s135, 8
      %s137 = scalar_lea.vmem %s0, %s136
      %s138 = smul.u32 2, %s17
      %p139 = scmp.lt.s32.totalorder %s16, 1
      %s140 = scalar_select %p139, %s16, 1
      %s141 = smul.addr %s140, 8
      %s142 = scalar_lea.vmem %s1, %s141
      %p143 = scmp.eq.s32.totalorder %s17, 0
      // Predicated region
      $region25: #{eca_block.2} parent=23 // pred_check
        %p144 = pneg %p143
      $region26: #{eca_block.2} parent=23 // pred_check_branch
        %146 = sbr.rel (%p144) target = $region28
      $region27: #{eca_block.2} parent=23 // pred_region
        %vm147 = vcmask 7168
        %148 = vst.msk [vmem:[%s142] sm:$0xff] %vm147, 0.0
      $region28: #{eca_block.2} parent=23 // pred_fallthru
        _
      %v149 = vld [vmem:[%s137] sm:$0xff]
      %v150 = vld [vmem:[%s137 + $0x8] sm:$0xff]
      %v151 = vld [vmem:[%s142] sm:$0xff]
      %v152 = vadd.f32 %v149, %v150
      %153 = vadd.xlane.f32.xlu0 %v152
      %v154 = vpop.xlane.xlu0 %153
      %v155 = vadd.f32 %v151, %v154
      %vm156 = vcmask 7168
      %157 = vst.msk [vmem:[%s142] sm:$0xff] %vm156, %v155
      %p158 = scmp.lt.s32.totalorder %s16, 1
      %s159 = scalar_select %p158, %s16, 1
      %s160 = smul.addr %s159, 8
      %s161 = scalar_lea.vmem %s1, %s160
      // Predicated region
      $region29: #{eca_block.2} parent=23 // pred_check
        %p162 = pneg %p70
      $region30: #{eca_block.2} parent=23 // pred_check_branch
        %164 = sbr.rel (%p162) target = $region32
      $region31: #{eca_block.2} parent=23 // pred_region
        _
      $region32: #{eca_block.2} parent=23 // pred_fallthru
        _
    $region24: #{eca_block.2} parent=5 // pred_fallthru
      _
    %p165 = scmp.le.s32.totalorder 2, %s7
    // Predicated region
    $region33: #{eca_block.2} parent=5 // pred_check
      %p166 = pneg %p165
    $region34: #{eca_block.2} parent=5 // pred_check_branch
      %168 = sbr.rel (%p166) target = $region36
    $region35: #{eca_block.2} parent=5 // pred_region
      %s169 = ssub.s32 %s7, 2
      // Predicated region
      $region37: #{eca_block.2} parent=35 // pred_check
        %p170 = pneg %p76
      $region38: #{eca_block.2} parent=35 // pred_check_branch
        %172 = sbr.rel (%p170) target = $region40
      $region39: #{eca_block.2} parent=35 // pred_region
        %p173 = scmp.lt.s32.totalorder %s18, 1
        %s174 = scalar_select %p173, %s18, 1
        %s175 = smul.addr %s174, 8
        %s176 = scalar_lea.vmem %s1, %s175
      $region40: #{eca_block.2} parent=35 // pred_fallthru
        _
    $region36: #{eca_block.2} parent=5 // pred_fallthru
      _
  $region6: #{eca_block.2} parent=0 // loop_footer
    %s11 = sadd.s32 1, %s7
  $region7: #{eca_block.2} parent=0 // loop_footer_branch
    %6 = sbr.rel target = $region3
  $region8: #{eca_block.2} parent=0 // loop_exit
    _

// kernel: eca_block.3
$region0: #{eca_block.3}
  #allocation0 [shape = 'u32[]', space=smem, size = 0x4, offset = 0x4, fixed_abs, tag = 'smem constant byte address 0x4 - core index']
  #allocation1 [shape = 'u32[72,128]{1,0:T(1,128)}', space=vmem, size = 0x9000, scoped, tag = 'internal scratch']
  %s0 = inlined_call_operand.vmem [shape: f32[16,256], index: 0, kind: input, shape index: {}]
  %s1 = inlined_call_operand.vmem [shape: f32[16,1], index: 1, kind: input, shape index: {}]
  %s2 = inlined_call_operand.vmem [shape: f32[16,256], index: 2, kind: output, shape index: {}]
  %s3 = sld [smem:[#allocation0]]
  $region41: #{eca_block.3} parent=0
    _
  %s5 = ssub.s32 1, %s3
  %s6 = scalar_select 0, %s5, %s3
  loop: start=0, step=1, limit=4
  $region2: #{eca_block.3} parent=0 // loop_pre_header
    _
  $region3: #{eca_block.3} parent=0 // loop_header
    %s8 = sphi 0, %s12
    %p9 = scmp.ge.s32.totalorder %s8, 4
    %s15 = sphi 0, %s27
    %s16 = sphi 0, %s23
    %s17 = sphi 0, %s15
    %s18 = sphi 0, %s16
    %s19 = sphi 0, %s17
    %s20 = sphi 0, %s18
    %s32 = sphi 0, %s34
    %s35 = sphi 0, %s32
    %s36 = sphi 0, %s35
    %s52 = sphi 0, %s36
    %s58 = sphi 0, %s60
    %s61 = sphi 0, %s58
    %s62 = sphi 0, %s61
    %s78 = sphi 0, %s62
    %s86 = sphi 0, %s88
    %s89 = sphi 0, %s86
    %s90 = sphi 0, %s89
    %s106 = sphi 0, %s90
  $region4: #{eca_block.3} parent=0 // loop_header_branch
    %11 = sbr.rel (%p9) target = $region8
  $region5: #{eca_block.3} parent=0 // loop_body
    %s13 = ssub.s32 %s8, 1
    %s14 = ssub.s32 %s8, 2
    %s21 = sadd.s32 1, %s16
    %p22 = scmp.ge.s32.totalorder %s21, 1
    %s23 = scalar_select %p22, 0, %s21
    %s24 = sadd.s32 1, %s15
    %s25 = scalar_select %p22, %s24, %s15
    %p26 = scmp.ge.s32.totalorder %s25, 2
    %s27 = scalar_select %p26, 0, %s25
    %s28 = ssub.s32 %s15, %s27
    %s29 = ssub.s32 %s16, %s23
    %s30 = sor.u32 %s28, %s29
    %p31 = scmp.eq.s32.totalorder %s30, 0
    %s33 = sadd.s32 %s32, 1
    %s34 = scalar_select %p31, %s32, %s33
    %p37 = pneg %p31
    %p38 = scmp.eq.s32.totalorder %s8, 1
    %p39 = por %p37, %p38
    %p40 = scmp.ne.s32.totalorder %s32, %s35
    %p41 = scmp.eq.s32.totalorder %s8, 0
    %p42 = por %p40, %p41
    %p43 = scmp.ne.s32.totalorder %s32, %s35
    %p44 = scmp.eq.s32.totalorder %s13, 1
    %p45 = por %p43, %p44
    %p46 = scmp.ne.s32.totalorder %s35, %s36
    %p47 = scmp.eq.s32.totalorder %s13, 0
    %p48 = por %p46, %p47
    %p49 = scmp.ne.s32.totalorder %s35, %s36
    %p50 = scmp.eq.s32.totalorder %s14, 1
    %p51 = por %p49, %p50
    %p53 = scmp.ne.s32.totalorder %s36, %s52
    %p54 = scmp.eq.s32.totalorder %s14, 0
    %p55 = por %p53, %p54
    %s56 = ssub.s32 %s15, %s27
    %p57 = scmp.eq.s32.totalorder %s56, 0
    %s59 = sadd.s32 %s58, 1
    %s60 = scalar_select %p57, %s58, %s59
    %p63 = pneg %p57
    %p64 = scmp.eq.s32.totalorder %s8, 1
    %p65 = por %p63, %p64
    %p66 = scmp.ne.s32.totalorder %s58, %s61
    %p67 = scmp.eq.s32.totalorder %s8, 0
    %p68 = por %p66, %p67
    %p69 = scmp.ne.s32.totalorder %s58, %s61
    %p70 = scmp.eq.s32.totalorder %s13, 1
    %p71 = por %p69, %p70
    %p72 = scmp.ne.s32.totalorder %s61, %s62
    %p73 = scmp.eq.s32.totalorder %s13, 0
    %p74 = por %p72, %p73
    %p75 = scmp.ne.s32.totalorder %s61, %s62
    %p76 = scmp.eq.s32.totalorder %s14, 1
    %p77 = por %p75, %p76
    %p79 = scmp.ne.s32.totalorder %s62, %s78
    %p80 = scmp.eq.s32.totalorder %s14, 0
    %p81 = por %p79, %p80
    %s82 = ssub.s32 %s15, %s27
    %s83 = ssub.s32 %s16, %s23
    %s84 = sor.u32 %s82, %s83
    %p85 = scmp.eq.s32.totalorder %s84, 0
    %s87 = sadd.s32 %s86, 1
    %s88 = scalar_select %p85, %s86, %s87
    %p91 = pneg %p85
    %p92 = scmp.eq.s32.totalorder %s8, 1
    %p93 = por %p91, %p92
    %p94 = scmp.ne.s32.totalorder %s86, %s89
    %p95 = scmp.eq.s32.totalorder %s8, 0
    %p96 = por %p94, %p95
    %p97 = scmp.ne.s32.totalorder %s86, %s89
    %p98 = scmp.eq.s32.totalorder %s13, 1
    %p99 = por %p97, %p98
    %p100 = scmp.ne.s32.totalorder %s89, %s90
    %p101 = scmp.eq.s32.totalorder %s13, 0
    %p102 = por %p100, %p101
    %p103 = scmp.ne.s32.totalorder %s89, %s90
    %p104 = scmp.eq.s32.totalorder %s14, 1
    %p105 = por %p103, %p104
    %p107 = scmp.ne.s32.totalorder %s90, %s106
    %p108 = scmp.eq.s32.totalorder %s14, 0
    %p109 = por %p107, %p108
    %p110 = scmp.le.s32.totalorder 1, %s8
    %p111 = scmp.lt.s32.totalorder %s8, 3
    %p112 = pnand %p110, %p111
    %p113 = pneg %p112
    // Predicated region
    $region9: #{eca_block.3} parent=5 // pred_check
      _
    $region10: #{eca_block.3} parent=5 // pred_check_branch
      %115 = sbr.rel (%p112) target = $region12
    $region11: #{eca_block.3} parent=5 // pred_region
      %s116 = ssub.s32 %s8, 1
    $region12: #{eca_block.3} parent=5 // pred_fallthru
      _
    %p117 = scmp.lt.s32.totalorder %s8, 2
    // Predicated region
    $region13: #{eca_block.3} parent=5 // pred_check
      %p118 = pneg %p117
    $region14: #{eca_block.3} parent=5 // pred_check_branch
      %120 = sbr.rel (%p118) target = $region16
    $region15: #{eca_block.3} parent=5 // pred_region
      // Predicated region
      $region17: #{eca_block.3} parent=15 // pred_check
        %p121 = pneg %p42
      $region18: #{eca_block.3} parent=15 // pred_check_branch
        %123 = sbr.rel (%p121) target = $region20
      $region19: #{eca_block.3} parent=15 // pred_region
        %s124 = smul.u32 2, %s16
        %p125 = scmp.lt.s32.totalorder %s15, 1
        %s126 = scalar_select %p125, %s15, 1
        %p127 = scmp.lt.s32.totalorder %s124, 1
        %s128 = scalar_select %p127, %s124, 1
        %s129 = smul.addr %s126, 2
        %s130 = sadd.s32 %s128, %s129
        %s131 = smul.addr %s130, 8
        %s132 = scalar_lea.vmem %s0, %s131
        %s133 = smul.u32 2, %s16
      $region20: #{eca_block.3} parent=15 // pred_fallthru
        _
      // Predicated region
      $region21: #{eca_block.3} parent=15 // pred_check
        %p134 = pneg %p68
      $region22: #{eca_block.3} parent=15 // pred_check_branch
        %136 = sbr.rel (%p134) target = $region24
      $region23: #{eca_block.3} parent=15 // pred_region
        %p137 = scmp.lt.s32.totalorder %s15, 1
        %s138 = scalar_select %p137, %s15, 1
        %s139 = smul.addr %s138, 8
        %s140 = scalar_lea.vmem %s1, %s139
      $region24: #{eca_block.3} parent=15 // pred_fallthru
        _
    $region16: #{eca_block.3} parent=5 // pred_fallthru
      _
    %p141 = scmp.le.s32.totalorder 1, %s8
    %p142 = scmp.lt.s32.totalorder %s8, 3
    %p143 = pnand %p141, %p142
    %p144 = pneg %p143
    // Predicated region
    $region25: #{eca_block.3} parent=5 // pred_check
      _
    $region26: #{eca_block.3} parent=5 // pred_check_branch
      %146 = sbr.rel (%p143) target = $region28
    $region27: #{eca_block.3} parent=5 // pred_region
      %s147 = ssub.s32 %s8, 1
      %s148 = smul.u32 2, %s18
      %p149 = scmp.lt.s32.totalorder %s17, 1
      %s150 = scalar_select %p149, %s17, 1
      %p151 = scmp.lt.s32.totalorder %s148, 1
      %s152 = scalar_select %p151, %s148, 1
      %s153 = smul.addr %s150, 2
      %s154 = sadd.s32 %s152, %s153
      %s155 = smul.addr %s154, 8
      %s156 = scalar_lea.vmem %s0, %s155
      %p157 = pneg %p48
      %p158 = pneg %p45
      %p159 = scmp.lt.s32.totalorder %s17, 1
      %s160 = scalar_select %p159, %s17, 1
      %s161 = smul.addr %s160, 8
      %s162 = scalar_lea.vmem %s1, %s161
      %p163 = pneg %p74
      %p164 = pneg %p71
      %p165 = pneg %p102
      %p166 = pneg %p99
      %s167 = smul.u32 2, %s18
      %p168 = scmp.lt.s32.totalorder %s17, 1
      %s169 = scalar_select %p168, %s17, 1
      %p170 = scmp.lt.s32.totalorder %s167, 1
      %s171 = scalar_select %p170, %s167, 1
      %s172 = smul.addr %s169, 2
      %s173 = sadd.s32 %s171, %s172
      %s174 = smul.addr %s173, 8
      %s175 = scalar_lea.vmem %s2, %s174
      %s176 = smul.u32 2, %s18
      %p177 = scmp.lt.s32.totalorder %s17, 1
      %s178 = scalar_select %p177, %s17, 1
      %p179 = scmp.lt.s32.totalorder %s176, 1
      %s180 = scalar_select %p179, %s176, 1
      %s181 = smul.addr %s178, 2
      %s182 = sadd.s32 %s180, %s181
      %s183 = smul.addr %s182, 8
      %s184 = scalar_lea.vmem %s0, %s183
      %s185 = smul.u32 2, %s18
      %p186 = scmp.lt.s32.totalorder %s17, 1
      %s187 = scalar_select %p186, %s17, 1
      %s188 = smul.addr %s187, 8
      %s189 = scalar_lea.vmem %s1, %s188
      %s190 = smul.u32 2, %s18
      %p191 = scmp.lt.s32.totalorder %s17, 1
      %s192 = scalar_select %p191, %s17, 1
      %p193 = scmp.lt.s32.totalorder %s190, 1
      %s194 = scalar_select %p193, %s190, 1
      %s195 = smul.addr %s192, 2
      %s196 = sadd.s32 %s194, %s195
      %s197 = smul.addr %s196, 8
      %s198 = scalar_lea.vmem %s2, %s197
      %s199 = smul.u32 2, %s18
      %v200 = vld [vmem:[%s184] sm:$0xff]
      %v201 = vld [vmem:[%s184 + $0x8] sm:$0xff]
      %v202 = vld [vmem:[%s189] sm:$0xff]
      %204 = vset.pattern.permute.xlu0 0
      %205 = vperm.xlu0 %204, %v202
      %v206 = vpop.permute.xlu0 %205
      %v208 = vmul.f32 %v200, %v206
      %v209 = vmul.f32 %v201, %v206
      %210 = vst [vmem:[%s198] sm:$0xff] %v208
      %211 = vst [vmem:[%s198 + $0x8] sm:$0xff] %v209
      %s212 = smul.u32 2, %s18
      %p213 = scmp.lt.s32.totalorder %s17, 1
      %s214 = scalar_select %p213, %s17, 1
      %p215 = scmp.lt.s32.totalorder %s212, 1
      %s216 = scalar_select %p215, %s212, 1
      %s217 = smul.addr %s214, 2
      %s218 = sadd.s32 %s216, %s217
      %s219 = smul.addr %s218, 8
      %s220 = scalar_lea.vmem %s2, %s219
      // Predicated region
      $region29: #{eca_block.3} parent=27 // pred_check
        %p221 = pneg %p99
      $region30: #{eca_block.3} parent=27 // pred_check_branch
        %223 = sbr.rel (%p221) target = $region32
      $region31: #{eca_block.3} parent=27 // pred_region
        %s224 = smul.u32 2, %s18
      $region32: #{eca_block.3} parent=27 // pred_fallthru
        _
    $region28: #{eca_block.3} parent=5 // pred_fallthru
      _
    %p225 = scmp.le.s32.totalorder 2, %s8
    // Predicated region
    $region33: #{eca_block.3} parent=5 // pred_check
      %p226 = pneg %p225
    $region34: #{eca_block.3} parent=5 // pred_check_branch
      %228 = sbr.rel (%p226) target = $region36
    $region35: #{eca_block.3} parent=5 // pred_region
      %s229 = ssub.s32 %s8, 2
      // Predicated region
      $region37: #{eca_block.3} parent=35 // pred_check
        %p230 = pneg %p105
      $region38: #{eca_block.3} parent=35 // pred_check_branch
        %232 = sbr.rel (%p230) target = $region40
      $region39: #{eca_block.3} parent=35 // pred_region
        %s233 = smul.u32 2, %s20
        %p234 = scmp.lt.s32.totalorder %s19, 1
        %s235 = scalar_select %p234, %s19, 1
        %p236 = scmp.lt.s32.totalorder %s233, 1
        %s237 = scalar_select %p236, %s233, 1
        %s238 = smul.addr %s235, 2
        %s239 = sadd.s32 %s237, %s238
        %s240 = smul.addr %s239, 8
        %s241 = scalar_lea.vmem %s2, %s240
      $region40: #{eca_block.3} parent=35 // pred_fallthru
        _
    $region36: #{eca_block.3} parent=5 // pred_fallthru
      _
  $region6: #{eca_block.3} parent=0 // loop_footer
    %s12 = sadd.s32 1, %s8
  $region7: #{eca_block.3} parent=0 // loop_footer_branch
    %7 = sbr.rel target = $region3
  $region8: #{eca_block.3} parent=0 // loop_exit
    _

</llo_original>
